<compile_context>
chip_gen: v7x
topology: tpu7x:2x2x1
jax: 0.10.0
libtpu: 0.0.40
codegen_flags: <defaults>
</compile_context>

<pallas_src>
import functools

import jax
import jax.numpy as jnp
from jax.experimental import pallas as pl
from jax.experimental.pallas import tpu as pltpu


# ----------------------------------------------------------------------------
# Kernel
# ----------------------------------------------------------------------------
def _head_kernel(x_ref, w_ref, s_ref, b_ref, o_ref):
    # x_ref: (Bp, D)  w_ref: (D, tn)  s_ref/b_ref: (1, tn) f32  o_ref: (Bp, tn)
    w = w_ref[...]
    if w.dtype != x_ref.dtype:
        # Quantized (int8 / fp8) weight streaming: exact upcast to the compute
        # dtype; elementwise cast is far faster than the HBM stream feeding it.
        w = w.astype(x_ref.dtype)
    acc = jnp.dot(x_ref[...], w, preferred_element_type=jnp.float32)
    # Per-column dequant scale (== 1.0 for f32/bf16 streaming) + bias.
    o_ref[...] = (acc * s_ref[...] + b_ref[...]).astype(o_ref.dtype)


# ----------------------------------------------------------------------------
# Tiling helpers
# ----------------------------------------------------------------------------
def _round_up(x, m):
    return (x + m - 1) // m * m


def _vmem_capacity_bytes():
    try:
        return int(pltpu.get_tpu_info().vmem_capacity_bytes)
    except Exception:
        # Conservative fallback: v7x per-TensorCore VMEM.
        return 64 * 1024 * 1024


def _max_tile_n(d_model, b_pad, w_bytes, x_bytes, o_bytes, vmem_cap):
    """Largest 128-multiple column tile fitting ~5/8 of VMEM (double-buffered)."""
    budget = vmem_cap * 5 // 8
    resident = 2 * b_pad * d_model * x_bytes + (1 << 20)           # activations + headroom
    per_col = 2 * (d_model * w_bytes + b_pad * o_bytes + 2 * 4)    # weight/out/bias+scale (x2 buf)
    tn = (budget - resident) // per_col
    return max(128, tn // 128 * 128)


def _pick_tile_n(d_model, n_out, b_pad, w_bytes, x_bytes, o_bytes, vmem_cap):
    n128 = _round_up(n_out, 128)
    tn_cap = min(_max_tile_n(d_model, b_pad, w_bytes, x_bytes, o_bytes, vmem_cap), n128)

    # Heuristic generation detect: 64 MiB per-TC VMEM => v7x-like, 2 TensorCores.
    two_cores = vmem_cap <= (64 << 20)

    # Minimum weight-tile size so the ~0.35 us per-step overhead stays small;
    # matters most at v7x's 3.2 TB/s HBM.
    min_tile_bytes = (8 << 20) if two_cores else (4 << 20)
    tn_floor = min(
        _round_up(max(min_tile_bytes // max(1, d_model * w_bytes), 128), 128),
        tn_cap)

    def steps_of(t):
        return -(-n128 // t)

    tn = tn_cap  # biggest tile that fits the budget

    # Keep enough steps for DMA/compute overlap (and both TCs on v7x), but
    # never shrink the weight tile below the per-step-overhead floor.
    min_steps = 4 if two_cores else 2
    if steps_of(tn) < min_steps and n128 >= min_steps * 128:
        cand = max(128, (n128 // min_steps) // 128 * 128)
        tn = max(tn_floor, min(tn, cand))

    # v7x: prefer an even grid-step count so the "parallel" axis splits evenly
    # across the two TensorCores (odd small counts leave one core idle a step).
    if two_cores and steps_of(tn) % 2 == 1:
        t = tn
        while steps_of(t) % 2 == 1 and t - 128 >= tn_floor:
            t -= 128
        if steps_of(t) % 2 == 0:
            tn = t

    return max(tn, 128)


# ----------------------------------------------------------------------------
# One-time weight preparation (call at parameter-load time, NOT per forward)
# ----------------------------------------------------------------------------
def prepare_head_weight(weight, stream_dtype=jnp.bfloat16):
    """Convert the (d_model, G*V) weight for low-precision streaming — ONCE.

    Doing this per call would re-read/re-write the whole weight through HBM and
    cancel the streaming savings; cache the result with the model parameters.

    stream_dtype options:
      jnp.float32 / jnp.bfloat16        -> plain cast, scales are all-ones.
      jnp.int8                          -> per-column symmetric quant (v5e/v6e MXU-friendly).
      jnp.float8_e4m3fn (v7x)           -> per-column scaled fp8.

    Returns (w_stream (d_model, G*V), col_scales (G*V,) float32).
    """
    weight = jnp.asarray(weight)
    n = weight.shape[-1]
    sd = jnp.dtype(stream_dtype) if stream_dtype is not None else jnp.dtype(weight.dtype)

    if sd == jnp.dtype(weight.dtype):
        return weight, jnp.ones((n,), jnp.float32)
    if sd in (jnp.dtype(jnp.float32), jnp.dtype(jnp.bfloat16), jnp.dtype(jnp.float16)):
        return weight.astype(sd), jnp.ones((n,), jnp.float32)

    # Quantized streaming with per-column scales.
    w32 = weight.astype(jnp.float32)
    if sd == jnp.dtype(jnp.int8):
        qmax = 127.0
    else:
        qmax = float(jnp.finfo(sd).max)  # e.g. 448 for float8_e4m3fn
    amax = jnp.max(jnp.abs(w32), axis=0)
    scale = jnp.maximum(amax / qmax, 1e-12)
    q = w32 / scale
    if sd == jnp.dtype(jnp.int8):
        wq = jnp.clip(jnp.round(q), -qmax, qmax).astype(jnp.int8)
    else:
        wq = q.astype(sd)
    return wq, scale.astype(jnp.float32)


# ----------------------------------------------------------------------------
# Jitted implementation (static tiling parameters)
# ----------------------------------------------------------------------------
@functools.partial(jax.jit, static_argnames=("G", "V", "tn", "b_pad", "vmem_limit"))
def _head_impl(cls_token, weight, col_scales, bias, *, G, V, tn, b_pad, vmem_limit):
    B, D = cls_token.shape
    N = G * V
    steps = pl.cdiv(N, tn)

    # Compute dtype: bf16 whenever the weight is streamed in a narrow dtype
    # (MXU-native, f32 accumulate); f32 path keeps exact Linear parity.
    x_dtype = cls_token.dtype if jnp.dtype(weight.dtype) == jnp.dtype(jnp.float32) \
        else jnp.bfloat16

    x = cls_token
    if b_pad != B:
        x = jnp.pad(x, ((0, b_pad - B), (0, 0)))   # tiny (B, D) pad only
    x = x.astype(x_dtype)                           # pre-cast once, outside the grid loop

    s2 = col_scales.reshape(1, N).astype(jnp.float32)
    b2 = bias.reshape(1, N).astype(jnp.float32)

    w_bytes = jnp.dtype(weight.dtype).itemsize
    o_bytes = jnp.dtype(cls_token.dtype).itemsize
    x_bytes = jnp.dtype(x_dtype).itemsize

    cost = pl.CostEstimate(
        flops=2 * b_pad * D * N,
        transcendentals=0,
        bytes_accessed=(D * N * w_bytes          # weight stream (dominant)
                        + b_pad * N * o_bytes    # output
                        + b_pad * D * x_bytes    # activations
                        + 2 * N * 4))            # bias + scales

    out_flat = pl.pallas_call(
        _head_kernel,
        out_shape=jax.ShapeDtypeStruct((b_pad, N), cls_token.dtype),
        grid_spec=pltpu.PrefetchScalarGridSpec(
            num_scalar_prefetch=0,
            grid=(steps,),                                    # ragged last block OK: no weight pad
            in_specs=[
                pl.BlockSpec((b_pad, D), lambda j: (0, 0)),   # activations, resident
                pl.BlockSpec((D, tn), lambda j: (0, j)),      # weight column tile (streamed)
                pl.BlockSpec((1, tn), lambda j: (0, j)),      # per-column scales
                pl.BlockSpec((1, tn), lambda j: (0, j)),      # bias
            ],
            out_specs=pl.BlockSpec((b_pad, tn), lambda j: (0, j)),
        ),
        compiler_params=pltpu.CompilerParams(
            dimension_semantics=("parallel",),
            vmem_limit_bytes=vmem_limit),
        cost_estimate=cost,
    )(x, weight, s2, b2)

    out = out_flat if b_pad == B else out_flat[:B]
    return out.reshape(B, G, V)


# ----------------------------------------------------------------------------
# Public wrapper (tile selection happens outside the trace)
# ----------------------------------------------------------------------------
def whole_genome_expression_head(cls_token, weight, bias, *,
                                 total_gene_count, expression_vocab_size,
                                 col_scales=None, tile_n=None):
    """Forward pass of WholeGenomeExpressionPredictionHead.

    Args:
      cls_token:  (B, d_model) float32.
      weight:     (d_model, G*V) in the STREAMING dtype — PyTorch fc.weight is
                  (G*V, d_model); pass its transpose.  For bf16/int8/fp8
                  streaming, convert ONCE with `prepare_head_weight` and reuse.
      bias:       (G*V,) float32.
      col_scales: (G*V,) float32 dequant scales from `prepare_head_weight`
                  (None => all-ones, i.e. unquantized weight).
      tile_n:     optional explicit N tile (multiple of 128); auto-sized from
                  VMEM otherwise.  Always clamped to the VMEM budget.
    Returns:
      (B, G, V) logits with cls_token's dtype.
    """
    B, D = cls_token.shape
    N = total_gene_count * expression_vocab_size
    assert weight.shape == (D, N), (weight.shape, (D, N))
    assert bias.shape == (N,), (bias.shape, (N,))

    if col_scales is None:
        col_scales = jnp.ones((N,), jnp.float32)

    b_pad = _round_up(max(B, 1), 8)
    w_bytes = jnp.dtype(weight.dtype).itemsize
    x_bytes = 4 if jnp.dtype(weight.dtype) == jnp.dtype(jnp.float32) else 2
    o_bytes = jnp.dtype(cls_token.dtype).itemsize
    vmem_cap = _vmem_capacity_bytes()

    tn_cap = min(_max_tile_n(D, b_pad, w_bytes, x_bytes, o_bytes, vmem_cap),
                 _round_up(N, 128))
    if tile_n is None:
        tn = _pick_tile_n(D, N, b_pad, w_bytes, x_bytes, o_bytes, vmem_cap)
    else:
        tn = int(tile_n)
        assert tn % 128 == 0 and tn >= 128, \
            f"tile_n must be a multiple of 128, got {tn}"
        tn = min(tn, tn_cap)          # clamp to the VMEM budget (v7x 64 MiB guard)
    assert tn % 128 == 0 and tn >= 128

    # Scoped VMEM sized for the double-buffered tiles (plus headroom).
    need = (2 * D * tn * w_bytes            # weight tile, double buffered
            + 2 * b_pad * tn * o_bytes      # output tile, double buffered
            + 4 * tn * 4                    # bias + scale tiles, double buffered
            + 2 * b_pad * D * x_bytes)      # resident activations
    vmem_limit = int(min(max(need + (4 << 20), 32 << 20), vmem_cap * 3 // 4))

    return _head_impl(cls_token, weight, col_scales, bias,
                      G=total_gene_count, V=expression_vocab_size,
                      tn=tn, b_pad=b_pad, vmem_limit=vmem_limit)


# ----------------------------------------------------------------------------
# Self-test
# ----------------------------------------------------------------------------
if __name__ == "__main__":
    batch = 2
    d_model = 32
    total_gene_count = 16
    expression_vocab_size = 8
    N = total_gene_count * expression_vocab_size  # 128

    key = jax.random.PRNGKey(0)
    k_x, k_w, k_b = jax.random.split(key, 3)

    cls_token = jax.random.normal(k_x, (batch, d_model), dtype=jnp.float32)
    bound = 1.0 / (d_model ** 0.5)
    weight = jax.random.uniform(k_w, (d_model, N), dtype=jnp.float32,
                                minval=-bound, maxval=bound)
    bias = jax.random.uniform(k_b, (N,), dtype=jnp.float32,
                              minval=-bound, maxval=bound)

    ref = (cls_token @ weight + bias).reshape(batch, total_gene_count,
                                              expression_vocab_size)

    # 1) f32 streaming: exact nn.Linear parity path.
    logits = whole_genome_expression_head(
        cls_token, weight, bias,
        total_gene_count=total_gene_count,
        expression_vocab_size=expression_vocab_size)
    jax.block_until_ready(logits)
    assert logits.shape == (batch, total_gene_count, expression_vocab_size)
    assert jnp.allclose(logits, ref, atol=1e-5, rtol=1e-5)

    # 2) Default production path: bf16 streaming, weight converted ONCE.
    w_bf16, s_bf16 = prepare_head_weight(weight, jnp.bfloat16)
    jax.block_until_ready(w_bf16)
    logits_bf16 = whole_genome_expression_head(
        cls_token, w_bf16, bias, col_scales=s_bf16,
        total_gene_count=total_gene_count,
        expression_vocab_size=expression_vocab_size)
    jax.block_until_ready(logits_bf16)
    assert jnp.allclose(logits_bf16, ref, atol=3e-2, rtol=3e-2)

    # 3) int8 streaming with cached per-column scales (v5e/v6e; use
    #    jnp.float8_e4m3fn for the v7x analogue).
    w_i8, s_i8 = prepare_head_weight(weight, jnp.int8)
    jax.block_until_ready(w_i8)
    logits_i8 = whole_genome_expression_head(
        cls_token, w_i8, bias, col_scales=s_i8,
        total_gene_count=total_gene_count,
        expression_vocab_size=expression_vocab_size)
    jax.block_until_ready(logits_i8)
    assert jnp.allclose(logits_i8, ref, atol=1e-1, rtol=1e-1)

    print("KERNEL_OK")
</pallas_src>

<mosaic_0001>
module attributes {stable_mosaic.version = 11 : i64} {
  func.func @_head_kernel(%arg0: i32, %arg1: memref<8x32xf32, #tpu.memory_space<vmem>>, %arg2: memref<32x128xf32, #tpu.memory_space<vmem>>, %arg3: memref<1x128xf32, #tpu.memory_space<vmem>>, %arg4: memref<1x128xf32, #tpu.memory_space<vmem>>, %arg5: memref<8x128xf32, #tpu.memory_space<vmem>>) attributes {dimension_semantics = [#tpu.dimension_semantics<parallel>], iteration_bounds = array<i64: 1>, scalar_prefetch = 0 : i64, scratch_operands = 0 : i64, tpu.core_type = #tpu.core_type<tc>, window_params = [{pipeline_mode = #tpu.pipeline_mode<synchronous>, transform_indices = @transform_0, window_bounds = array<i64: 8, 32>}, {transform_indices = @transform_1, window_bounds = array<i64: 32, 128>}, {transform_indices = @transform_2, window_bounds = array<i64: 1, 128>}, {transform_indices = @transform_3, window_bounds = array<i64: 1, 128>}, {transform_indices = @transform_4, window_bounds = array<i64: 8, 128>}]} {
    %c0 = arith.constant 0 : index
    %c0_0 = arith.constant 0 : index
    %0 = vector.load %arg2[%c0, %c0_0] : memref<32x128xf32, #tpu.memory_space<vmem>>, vector<32x128xf32>
    %c0_1 = arith.constant 0 : index
    %c0_2 = arith.constant 0 : index
    %1 = vector.load %arg1[%c0_1, %c0_2] : memref<8x32xf32, #tpu.memory_space<vmem>>, vector<8x32xf32>
    %cst = arith.constant dense<0.000000e+00> : vector<8x128xf32>
    %2 = tpu.matmul %1, %0, %cst {dimension_numbers = #tpu.dot_dimension_numbers<[1], [0], [0], [1], [0, 0, 1, 1], [], []>} : vector<8x32xf32>, vector<32x128xf32>, vector<8x128xf32> -> vector<8x128xf32>
    %c0_3 = arith.constant 0 : index
    %c0_4 = arith.constant 0 : index
    %3 = vector.load %arg3[%c0_3, %c0_4] : memref<1x128xf32, #tpu.memory_space<vmem>>, vector<1x128xf32>
    %4 = vector.broadcast %3 : vector<1x128xf32> to vector<8x128xf32>
    %5 = arith.mulf %2, %4 : vector<8x128xf32>
    %c0_5 = arith.constant 0 : index
    %c0_6 = arith.constant 0 : index
    %6 = vector.load %arg4[%c0_5, %c0_6] : memref<1x128xf32, #tpu.memory_space<vmem>>, vector<1x128xf32>
    %7 = vector.broadcast %6 : vector<1x128xf32> to vector<8x128xf32>
    %8 = arith.addf %5, %7 : vector<8x128xf32>
    %c0_7 = arith.constant 0 : index
    %c0_8 = arith.constant 0 : index
    %9 = vector.load %arg5[%c0_7, %c0_8] : memref<8x128xf32, #tpu.memory_space<vmem>>, vector<8x128xf32>
    tpu.vector_store %arg5[%c0_7, %c0_8], %8 {strides = array<i32>} : memref<8x128xf32, #tpu.memory_space<vmem>>, vector<8x128xf32>,
    return
  }
  func.func @transform_0(%arg0: i32) -> (i32, i32) {
    %c0_i32 = arith.constant 0 : i32
    %c0_i32_0 = arith.constant 0 : i32
    %c0_i32_1 = arith.constant 0 : i32
    return %c0_i32, %c0_i32_0 : i32, i32
  }
  func.func @transform_1(%arg0: i32) -> (i32, i32) {
    %c0_i32 = arith.constant 0 : i32
    %c0_i32_0 = arith.constant 0 : i32
    return %c0_i32, %arg0 : i32, i32
  }
  func.func @transform_2(%arg0: i32) -> (i32, i32) {
    %c0_i32 = arith.constant 0 : i32
    %c0_i32_0 = arith.constant 0 : i32
    return %c0_i32, %arg0 : i32, i32
  }
  func.func @transform_3(%arg0: i32) -> (i32, i32) {
    %c0_i32 = arith.constant 0 : i32
    %c0_i32_0 = arith.constant 0 : i32
    return %c0_i32, %arg0 : i32, i32
  }
  func.func @transform_4(%arg0: i32) -> (i32, i32) {
    %c0_i32 = arith.constant 0 : i32
    %c0_i32_0 = arith.constant 0 : i32
    return %c0_i32, %arg0 : i32, i32
  }
}

</mosaic_0001>

<llo_original>
// kernel: _head_impl.1
$region0: #{_head_impl.1}
  #allocation0 [shape = 'u32[]', space=smem, size = 0x4, offset = 0x4, fixed_abs, tag = 'smem constant byte address 0x4 - core index']
  #allocation1 [shape = 'u32[144,128]{1,0:T(1,128)}', space=vmem, size = 0x12000, scoped, tag = 'internal scratch']
  %s0 = inlined_call_operand.vmem [shape: f32[8,32], index: 0, kind: input, shape index: {}]
  %s1 = inlined_call_operand.hbm [shape: f32[32,128], index: 1, kind: input, shape index: {}]
  %s2 = inlined_call_operand.vmem [shape: f32[1,128], index: 2, kind: input, shape index: {}]
  %s3 = inlined_call_operand.vmem [shape: f32[1,128], index: 3, kind: input, shape index: {}]
  %s4 = inlined_call_operand.vmem [shape: f32[8,128], index: 4, kind: output, shape index: {}]
  %s5 = sld [smem:[#allocation0]]
  $region30: #{_head_impl.1} parent=0
    _
  %s7 = ssub.s32 1, %s5
  %s8 = scalar_select 0, %s7, %s5
  $region1: #{_head_impl.1} parent=0
    #allocation2 [shape = 'u8[16384]{0}', space=vmem, size = 0x4000, scoped, tag = 'input window, operand 1, single buffered']
    #allocation3 [shape = 's32[1]{0}', space=sflag, size = 0x4, scoped, tag = 'scoped memory for _head_impl.1']
    %9 = vsyncpa [#allocation3], 0
    // Predicated region
    $region2: #{_head_impl.1} parent=1 // pred_check
      _
    $region3: #{_head_impl.1} parent=1 // pred_check_branch
      %11 = sbr.rel (0) target = $region5
    $region4: #{_head_impl.1} parent=1 // pred_region
      _
    $region5: #{_head_impl.1} parent=1 // pred_fallthru
      _
    // Predicated region
    $region6: #{_head_impl.1} parent=1 // pred_check
      _
    $region7: #{_head_impl.1} parent=1 // pred_check_branch
      %13 = sbr.rel (0) target = $region9
    $region8: #{_head_impl.1} parent=1 // pred_region
      %s15 = ssub.s32 512, 512
      %16 = vsyncadd [#allocation3], %s15
      %s17 = sshll.u32 [#allocation2], 4
      %s18 = int_to_ptr.vmem [resolvable:$true] %s17
      %23 = dma.hbm_to_vmem [thread:$0]  %s1, 512, %s18, [#allocation3], 128, 128, 8
    $region9: #{_head_impl.1} parent=1 // pred_fallthru
      _
    // Predicated region
    $region10: #{_head_impl.1} parent=1 // pred_check
      _
    $region11: #{_head_impl.1} parent=1 // pred_check_branch
      %25 = sbr.rel (0) target = $region13
    $region12: #{_head_impl.1} parent=1 // pred_region
      _
    $region13: #{_head_impl.1} parent=1 // pred_fallthru
      _
    // Predicated region
    $region14: #{_head_impl.1} parent=1 // pred_check
      _
    $region15: #{_head_impl.1} parent=1 // pred_check_branch
      %27 = sbr.rel (0) target = $region17
    $region16: #{_head_impl.1} parent=1 // pred_region
      _
    $region17: #{_head_impl.1} parent=1 // pred_fallthru
      _
    // Predicated region
    $region18: #{_head_impl.1} parent=1 // pred_check
      _
    $region19: #{_head_impl.1} parent=1 // pred_check_branch
      %29 = sbr.rel (0) target = $region21
    $region20: #{_head_impl.1} parent=1 // pred_region
      %30 = dma.done [#allocation3], 512
    $region21: #{_head_impl.1} parent=1 // pred_fallthru
      _
    %v31 = vld [vmem:[#allocation2] sm:$0xff]
    %v32 = vld [vmem:[#allocation2 + $0x8] sm:$0xff]
    %v33 = vld [vmem:[#allocation2 + $0x10] sm:$0xff]
    %v34 = vld [vmem:[#allocation2 + $0x18] sm:$0xff]
    %v35 = vld [vmem:[%s0] sm:$0xff]
    %vm36 = vcmask 261120
    %v38 = vsel %vm36, %v35, 0
    %40 = vmatprep.subr.mxu0 0.0
    %41 = vmatpush1.msra.mxu0 %v31
    %42 = vmatprep.subr.mxu0 0.0
    %43 = vmatpush1.msra.mxu0 %v32
    %44 = vmatprep.subr.mxu0 0.0
    %45 = vmatpush1.msra.mxu0 %v33
    %46 = vmatprep.subr.mxu0 0.0
    %47 = vmatpush1.msra.mxu0 %v34
    %48 = vmatprep.subr.mxu0 0.0
    %49 = vmatpush1.msra.mxu0 0.0
    %50 = vmatprep.subr.mxu0 0.0
    %51 = vmatpush1.msra.mxu0 0.0
    %52 = vmatprep.subr.mxu0 0.0
    %53 = vmatpush1.msra.mxu0 0.0
    %54 = vmatprep.subr.mxu0 0.0
    %55 = vmatpush1.msra.mxu0 0.0
    %56 = vmatprep.subr.mxu0 0.0
    %57 = vmatpush1.msra.mxu0 0.0
    %58 = vmatprep.subr.mxu0 0.0
    %59 = vmatpush1.msra.mxu0 0.0
    %60 = vmatprep.subr.mxu0 0.0
    %61 = vmatpush1.msra.mxu0 0.0
    %62 = vmatprep.subr.mxu0 0.0
    %63 = vmatpush1.msra.mxu0 0.0
    %64 = vmatprep.subr.mxu0 0.0
    %65 = vmatpush1.msra.mxu0 0.0
    %66 = vmatprep.subr.mxu0 0.0
    %67 = vmatpush1.msra.mxu0 0.0
    %68 = vmatprep.subr.mxu0 0.0
    %69 = vmatpush1.msra.mxu0 0.0
    %70 = vmatprep.subr.mxu0 0.0
    %71 = vmatpush1.msra.mxu0 0.0
    %72 = vmatprep.subr.mxu0 0.0
    %73 = vmatpush1.msra.mxu0 0.0
    %74 = vmatprep.subr.mxu0 0.0
    %75 = vmatpush1.msra.mxu0 0.0
    %76 = vmatprep.subr.mxu0 0.0
    %77 = vmatpush1.msra.mxu0 0.0
    %78 = vmatprep.subr.mxu0 0.0
    %79 = vmatpush1.msra.mxu0 0.0
    %80 = vmatprep.subr.mxu0 0.0
    %81 = vmatpush1.msra.mxu0 0.0
    %82 = vmatprep.subr.mxu0 0.0
    %83 = vmatpush1.msra.mxu0 0.0
    %84 = vmatprep.subr.mxu0 0.0
    %85 = vmatpush1.msra.mxu0 0.0
    %86 = vmatprep.subr.mxu0 0.0
    %87 = vmatpush1.msra.mxu0 0.0
    %88 = vmatprep.subr.mxu0 0.0
    %89 = vmatpush1.msra.mxu0 0.0
    %90 = vmatprep.subr.mxu0 0.0
    %91 = vmatpush1.msra.mxu0 0.0
    %92 = vmatprep.subr.mxu0 0.0
    %93 = vmatpush1.msra.mxu0 0.0
    %94 = vmatprep.subr.mxu0 0.0
    %95 = vmatpush1.msra.mxu0 0.0
    %96 = vmatprep.subr.mxu0 0.0
    %97 = vmatpush1.msra.mxu0 0.0
    %98 = vmatprep.subr.mxu0 0.0
    %99 = vmatpush1.msra.mxu0 0.0
    %100 = vmatprep.subr.mxu0 0.0
    %101 = vmatpush1.msra.mxu0 0.0
    %102 = vmatprep.subr.mxu0 0.0
    %103 = vmatpush1.msra.mxu0 0.0
    %104 = vmatprep.mubr.f32.mxu0 0.0
    %105 = vmatmul.mubr.f32.gmra.mrb[0].mxu0 %v38
    %v106 = vpop.f32.mrb[0].mxu0
    %v107 = vadd.f32 0.0, %v106
    %v108 = vpop.f32.mrb[0].mxu0
    %109 = vdwg.mxu0
    %v110 = vld [vmem:[%s2] sm:$0x1]
    %v112 = vlaneseq
    %v113 = vshrl.u32 %v112, 7
    %v114 = vsub.s32 0, %v113
    %v115 = vrot.slane %v110, %v114
    %v117 = vmul.f32 %v107, %v115
    %v118 = vld [vmem:[%s3] sm:$0x1]
    %v120 = vlaneseq
    %v121 = vshrl.u32 %v120, 7
    %v122 = vsub.s32 0, %v121
    %v123 = vrot.slane %v118, %v122
    %v125 = vadd.f32 %v117, %v123
    %126 = vst [vmem:[%s4] sm:$0xff] %v125
    // Predicated region
    $region22: #{_head_impl.1} parent=1 // pred_check
      _
    $region23: #{_head_impl.1} parent=1 // pred_check_branch
      %128 = sbr.rel (0) target = $region25
    $region24: #{_head_impl.1} parent=1 // pred_region
      _
    $region25: #{_head_impl.1} parent=1 // pred_fallthru
      _
    // Predicated region
    $region26: #{_head_impl.1} parent=1 // pred_check
      _
    $region27: #{_head_impl.1} parent=1 // pred_check_branch
      %130 = sbr.rel (0) target = $region29
    $region28: #{_head_impl.1} parent=1 // pred_region
      _
    $region29: #{_head_impl.1} parent=1 // pred_fallthru
      _
    %131 = vsyncpa [#allocation3], 1

</llo_original>
